<compile_context>
chip_gen: v7x
topology: tpu7x:2x2x1
jax: 0.10.0
libtpu: 0.0.40
codegen_flags: <defaults>
</compile_context>

<pallas_src>
import functools

import jax
import jax.numpy as jnp
from jax.experimental import pallas as pl
from jax.experimental.pallas import tpu as pltpu

# Feature dims.  Input stays at its natural 784; hidden/output are padded to
# lane-dense multiples of 128 (zeros propagate harmlessly through matmul/ReLU).
IN_DIM = 784
HID_PAD = 256   # 200 -> 2 * 128
OUT_PAD = 128   # 10  -> 1 * 128


def _batch_dim_semantics():
    """CORE_PARALLEL on v7x (2 TCs/chip); plain 'parallel' elsewhere."""
    try:
        kind = jax.devices()[0].device_kind.lower()
    except Exception:  # pragma: no cover - defensive
        kind = ""
    if ("v7" in kind or "7x" in kind) and hasattr(pltpu, "CORE_PARALLEL"):
        return (pltpu.CORE_PARALLEL,)
    return ("parallel",)


_BATCH_SEMANTICS = _batch_dim_semantics()


def mlp_kernel(x_ref, w1_ref, b1_ref, w2_ref, b2_ref, w3_ref, b3_ref, o_ref):
    # x arrives as f32 and is cast to bf16 in-register (no HBM round trip).
    x = x_ref[...].astype(jnp.bfloat16)
    # fc1 + ReLU: bf16 operands on the MXU, f32 accumulation; bias/ReLU in f32.
    h1 = jnp.dot(x, w1_ref[...], preferred_element_type=jnp.float32)
    h1 = jnp.maximum(h1 + b1_ref[...], 0.0)
    # fc2 + ReLU
    h2 = jnp.dot(h1.astype(jnp.bfloat16), w2_ref[...],
                 preferred_element_type=jnp.float32)
    h2 = jnp.maximum(h2 + b2_ref[...], 0.0)
    # fc3 (no activation); store lane-dense bf16 (sliced/upcast by the wrapper).
    out = jnp.dot(h2.astype(jnp.bfloat16), w3_ref[...],
                  preferred_element_type=jnp.float32)
    o_ref[...] = (out + b3_ref[...]).astype(o_ref.dtype)


def _round_up(n, m):
    return ((n + m - 1) // m) * m


def _choose_tm(b):
    """Batch tile: 16-row multiples for tiny batches; 128..512 for large ones,
    preferring >= 2 grid steps so both v7x TensorCores get work."""
    if b < 128:
        return max(16, _round_up(b, 16))
    half = ((_round_up(b, 128) // 2) // 128) * 128
    return max(128, min(512, half))


def prepare_params(params):
    """One-time prep: zero-pad to lane-dense shapes, cast weights to bf16.
    w1 keeps its natural 784 input dim (only the output dim is padded)."""
    def pad_w(w, rows, cols):
        r, c = w.shape
        return jnp.pad(w, ((0, rows - r), (0, cols - c))).astype(jnp.bfloat16)

    def pad_b(b, cols):
        b2d = b.reshape(1, -1)
        return jnp.pad(b2d, ((0, 0), (0, cols - b2d.shape[-1]))).astype(jnp.float32)

    return {
        "w1": pad_w(params["w1"], IN_DIM, HID_PAD), "b1": pad_b(params["b1"], HID_PAD),
        "w2": pad_w(params["w2"], HID_PAD, HID_PAD), "b2": pad_b(params["b2"], HID_PAD),
        "w3": pad_w(params["w3"], HID_PAD, OUT_PAD), "b3": pad_b(params["b3"], OUT_PAD),
    }


@functools.partial(jax.jit, static_argnames=("out_features",))
def mlp_forward(x, prepared, out_features=10):
    """x: [B, ...] (flattened to [B, 784]); prepared: prepare_params output."""
    b = x.shape[0]
    x2 = x.reshape(b, -1).astype(jnp.float32)   # [B, 784], stays f32
    in_features = x2.shape[1]

    tm = _choose_tm(b)
    bp = _round_up(b, tm)
    if bp != b:
        # Row-only zero padding (no lane padding, no dtype expansion).
        x2 = jnp.pad(x2, ((0, bp - b), (0, 0)))

    w1, b1 = prepared["w1"], prepared["b1"]
    w2, b2 = prepared["w2"], prepared["b2"]
    w3, b3 = prepared["w3"], prepared["b3"]

    def resident(arr):
        # Whole-array block + constant index_map: DMA'd once, stays VMEM-resident
        # across all batch grid steps (no per-step weight re-fetch).
        return pl.BlockSpec(arr.shape, lambda i: (0,) * arr.ndim)

    flops = 2 * bp * (in_features * HID_PAD + HID_PAD * HID_PAD + HID_PAD * OUT_PAD)
    bytes_accessed = (
        bp * in_features * 4                 # x in (f32)
        + bp * OUT_PAD * 2                   # out (bf16)
        + (in_features * HID_PAD + HID_PAD * HID_PAD + HID_PAD * OUT_PAD) * 2  # weights
        + (HID_PAD + HID_PAD + OUT_PAD) * 4  # biases
    )

    out = pl.pallas_call(
        mlp_kernel,
        out_shape=jax.ShapeDtypeStruct((bp, OUT_PAD), jnp.bfloat16),
        grid=(bp // tm,),
        in_specs=[pl.BlockSpec((tm, in_features), lambda i: (i, 0))]
                 + [resident(a) for a in (w1, b1, w2, b2, w3, b3)],
        out_specs=pl.BlockSpec((tm, OUT_PAD), lambda i: (i, 0)),
        compiler_params=pltpu.CompilerParams(
            dimension_semantics=_BATCH_SEMANTICS,
        ),
        cost_estimate=pl.CostEstimate(
            flops=flops, transcendentals=0, bytes_accessed=bytes_accessed),
    )(x2, w1, b1, w2, b2, w3, b3)

    # Strip batch padding and the padded (all-zero) output lanes; upcast to f32.
    return out[:b, :out_features].astype(jnp.float32)


def init_params(key, input_size=784, hidden=200, output_size=10):
    """nn.Linear-style init (uniform +/- 1/sqrt(fan_in)); weights stored [in, out]."""
    ks = jax.random.split(key, 6)

    def linear(kw, kb, fan_in, fan_out):
        bound = 1.0 / jnp.sqrt(fan_in)
        w = jax.random.uniform(kw, (fan_in, fan_out), jnp.float32, -bound, bound)
        b = jax.random.uniform(kb, (fan_out,), jnp.float32, -bound, bound)
        return w, b

    w1, b1 = linear(ks[0], ks[1], input_size, hidden)
    w2, b2 = linear(ks[2], ks[3], hidden, hidden)
    w3, b3 = linear(ks[4], ks[5], hidden, output_size)
    return {"w1": w1, "b1": b1, "w2": w2, "b2": b2, "w3": w3, "b3": b3}


def reference_forward_f32(x, params):
    b = x.shape[0]
    h = x.reshape(b, -1).astype(jnp.float32)
    h = jnp.maximum(h @ params["w1"] + params["b1"], 0.0)
    h = jnp.maximum(h @ params["w2"] + params["b2"], 0.0)
    return h @ params["w3"] + params["b3"]


def reference_forward_bf16(x, params):
    """Emulates the kernel's numerics: bf16 operands, f32 accum, bf16 output."""
    f32, bf16 = jnp.float32, jnp.bfloat16
    b = x.shape[0]
    h = x.reshape(b, -1).astype(bf16)
    h = jnp.maximum(
        jnp.dot(h, params["w1"].astype(bf16), preferred_element_type=f32) + params["b1"], 0.0)
    h = jnp.maximum(
        jnp.dot(h.astype(bf16), params["w2"].astype(bf16), preferred_element_type=f32) + params["b2"], 0.0)
    out = jnp.dot(h.astype(bf16), params["w3"].astype(bf16), preferred_element_type=f32) + params["b3"]
    return out.astype(bf16).astype(f32)


if __name__ == "__main__":
    key = jax.random.PRNGKey(0)
    k_param, k_x = jax.random.split(key)

    params = init_params(k_param, input_size=784, hidden=200, output_size=10)
    prepared = prepare_params(params)  # one-time: pad + bf16-cast weights

    # MNIST-like input: [B, C, H, W] = [8, 1, 28, 28]; forward flattens to [B, 784].
    x = jax.random.normal(k_x, (8, 1, 28, 28), dtype=jnp.float32)

    out = mlp_forward(x, prepared, out_features=10)
    out = jax.block_until_ready(out)

    assert out.shape == (8, 10)
    ref_bf16 = reference_forward_bf16(x, params)
    ref_f32 = reference_forward_f32(x, params)
    # Tight check vs. a reference with identical bf16/f32-accum numerics.
    assert jnp.allclose(out, ref_bf16, atol=2e-3, rtol=2e-3), "mismatch vs bf16 reference"
    # Loose sanity check vs. the original full-f32 semantics.
    assert jnp.allclose(out, ref_f32, atol=5e-2, rtol=5e-2), "drifted from f32 reference"

    print("KERNEL_OK")
</pallas_src>

<mosaic_0001>
module attributes {stable_mosaic.version = 11 : i64} {
  func.func @mlp_kernel(%arg0: i32, %arg1: memref<16x784xf32, #tpu.memory_space<vmem>>, %arg2: memref<784x256xbf16, #tpu.memory_space<vmem>>, %arg3: memref<1x256xf32, #tpu.memory_space<vmem>>, %arg4: memref<256x256xbf16, #tpu.memory_space<vmem>>, %arg5: memref<1x256xf32, #tpu.memory_space<vmem>>, %arg6: memref<256x128xbf16, #tpu.memory_space<vmem>>, %arg7: memref<1x128xf32, #tpu.memory_space<vmem>>, %arg8: memref<16x128xbf16, #tpu.memory_space<vmem>>) attributes {dimension_semantics = [#tpu.dimension_semantics<parallel>], iteration_bounds = array<i64: 1>, scalar_prefetch = 0 : i64, scratch_operands = 0 : i64, tpu.core_type = #tpu.core_type<tc>, window_params = [{transform_indices = @transform_0, window_bounds = array<i64: 16, 784>}, {pipeline_mode = #tpu.pipeline_mode<synchronous>, transform_indices = @transform_1, window_bounds = array<i64: 784, 256>}, {pipeline_mode = #tpu.pipeline_mode<synchronous>, transform_indices = @transform_2, window_bounds = array<i64: 1, 256>}, {pipeline_mode = #tpu.pipeline_mode<synchronous>, transform_indices = @transform_3, window_bounds = array<i64: 256, 256>}, {pipeline_mode = #tpu.pipeline_mode<synchronous>, transform_indices = @transform_4, window_bounds = array<i64: 1, 256>}, {pipeline_mode = #tpu.pipeline_mode<synchronous>, transform_indices = @transform_5, window_bounds = array<i64: 256, 128>}, {pipeline_mode = #tpu.pipeline_mode<synchronous>, transform_indices = @transform_6, window_bounds = array<i64: 1, 128>}, {transform_indices = @transform_7, window_bounds = array<i64: 16, 128>}]} {
    %c0 = arith.constant 0 : index
    %c0_0 = arith.constant 0 : index
    %0 = vector.load %arg1[%c0, %c0_0] : memref<16x784xf32, #tpu.memory_space<vmem>>, vector<16x784xf32>
    %1 = arith.truncf %0 : vector<16x784xf32> to vector<16x784xbf16>
    %c0_1 = arith.constant 0 : index
    %c0_2 = arith.constant 0 : index
    %2 = vector.load %arg2[%c0_1, %c0_2] : memref<784x256xbf16, #tpu.memory_space<vmem>>, vector<784x256xbf16>
    %cst = arith.constant dense<0.000000e+00> : vector<16x256xf32>
    %3 = tpu.matmul %1, %2, %cst {dimension_numbers = #tpu.dot_dimension_numbers<[1], [0], [0], [1], [0, 0, 1, 1], [], []>} : vector<16x784xbf16>, vector<784x256xbf16>, vector<16x256xf32> -> vector<16x256xf32>
    %c0_3 = arith.constant 0 : index
    %c0_4 = arith.constant 0 : index
    %4 = vector.load %arg3[%c0_3, %c0_4] : memref<1x256xf32, #tpu.memory_space<vmem>>, vector<1x256xf32>
    %5 = vector.broadcast %4 : vector<1x256xf32> to vector<16x256xf32>
    %6 = arith.addf %3, %5 : vector<16x256xf32>
    %cst_5 = arith.constant 0.000000e+00 : f32
    %7 = vector.broadcast %cst_5 : f32 to vector<16x256xf32>
    %8 = arith.maximumf %6, %7 : vector<16x256xf32>
    %9 = arith.truncf %8 : vector<16x256xf32> to vector<16x256xbf16>
    %c0_6 = arith.constant 0 : index
    %c0_7 = arith.constant 0 : index
    %10 = vector.load %arg4[%c0_6, %c0_7] : memref<256x256xbf16, #tpu.memory_space<vmem>>, vector<256x256xbf16>
    %cst_8 = arith.constant dense<0.000000e+00> : vector<16x256xf32>
    %11 = tpu.matmul %9, %10, %cst_8 {dimension_numbers = #tpu.dot_dimension_numbers<[1], [0], [0], [1], [0, 0, 1, 1], [], []>} : vector<16x256xbf16>, vector<256x256xbf16>, vector<16x256xf32> -> vector<16x256xf32>
    %c0_9 = arith.constant 0 : index
    %c0_10 = arith.constant 0 : index
    %12 = vector.load %arg5[%c0_9, %c0_10] : memref<1x256xf32, #tpu.memory_space<vmem>>, vector<1x256xf32>
    %13 = vector.broadcast %12 : vector<1x256xf32> to vector<16x256xf32>
    %14 = arith.addf %11, %13 : vector<16x256xf32>
    %cst_11 = arith.constant 0.000000e+00 : f32
    %15 = vector.broadcast %cst_11 : f32 to vector<16x256xf32>
    %16 = arith.maximumf %14, %15 : vector<16x256xf32>
    %17 = arith.truncf %16 : vector<16x256xf32> to vector<16x256xbf16>
    %c0_12 = arith.constant 0 : index
    %c0_13 = arith.constant 0 : index
    %18 = vector.load %arg6[%c0_12, %c0_13] : memref<256x128xbf16, #tpu.memory_space<vmem>>, vector<256x128xbf16>
    %cst_14 = arith.constant dense<0.000000e+00> : vector<16x128xf32>
    %19 = tpu.matmul %17, %18, %cst_14 {dimension_numbers = #tpu.dot_dimension_numbers<[1], [0], [0], [1], [0, 0, 1, 1], [], []>} : vector<16x256xbf16>, vector<256x128xbf16>, vector<16x128xf32> -> vector<16x128xf32>
    %c0_15 = arith.constant 0 : index
    %c0_16 = arith.constant 0 : index
    %20 = vector.load %arg7[%c0_15, %c0_16] : memref<1x128xf32, #tpu.memory_space<vmem>>, vector<1x128xf32>
    %21 = vector.broadcast %20 : vector<1x128xf32> to vector<16x128xf32>
    %22 = arith.addf %19, %21 : vector<16x128xf32>
    %23 = arith.truncf %22 : vector<16x128xf32> to vector<16x128xbf16>
    %c0_17 = arith.constant 0 : index
    %c0_18 = arith.constant 0 : index
    %24 = vector.load %arg8[%c0_17, %c0_18] : memref<16x128xbf16, #tpu.memory_space<vmem>>, vector<16x128xbf16>
    tpu.vector_store %arg8[%c0_17, %c0_18], %23 {strides = array<i32>} : memref<16x128xbf16, #tpu.memory_space<vmem>>, vector<16x128xbf16>,
    return
  }
  func.func @transform_0(%arg0: i32) -> (i32, i32) {
    %c0_i32 = arith.constant 0 : i32
    %c0_i32_0 = arith.constant 0 : i32
    return %arg0, %c0_i32 : i32, i32
  }
  func.func @transform_1(%arg0: i32) -> (i32, i32) {
    %c0_i32 = arith.constant 0 : i32
    %c0_i32_0 = arith.constant 0 : i32
    %c0_i32_1 = arith.constant 0 : i32
    return %c0_i32, %c0_i32_0 : i32, i32
  }
  func.func @transform_2(%arg0: i32) -> (i32, i32) {
    %c0_i32 = arith.constant 0 : i32
    %c0_i32_0 = arith.constant 0 : i32
    %c0_i32_1 = arith.constant 0 : i32
    return %c0_i32, %c0_i32_0 : i32, i32
  }
  func.func @transform_3(%arg0: i32) -> (i32, i32) {
    %c0_i32 = arith.constant 0 : i32
    %c0_i32_0 = arith.constant 0 : i32
    %c0_i32_1 = arith.constant 0 : i32
    return %c0_i32, %c0_i32_0 : i32, i32
  }
  func.func @transform_4(%arg0: i32) -> (i32, i32) {
    %c0_i32 = arith.constant 0 : i32
    %c0_i32_0 = arith.constant 0 : i32
    %c0_i32_1 = arith.constant 0 : i32
    return %c0_i32, %c0_i32_0 : i32, i32
  }
  func.func @transform_5(%arg0: i32) -> (i32, i32) {
    %c0_i32 = arith.constant 0 : i32
    %c0_i32_0 = arith.constant 0 : i32
    %c0_i32_1 = arith.constant 0 : i32
    return %c0_i32, %c0_i32_0 : i32, i32
  }
  func.func @transform_6(%arg0: i32) -> (i32, i32) {
    %c0_i32 = arith.constant 0 : i32
    %c0_i32_0 = arith.constant 0 : i32
    %c0_i32_1 = arith.constant 0 : i32
    return %c0_i32, %c0_i32_0 : i32, i32
  }
  func.func @transform_7(%arg0: i32) -> (i32, i32) {
    %c0_i32 = arith.constant 0 : i32
    %c0_i32_0 = arith.constant 0 : i32
    return %arg0, %c0_i32 : i32, i32
  }
}

</mosaic_0001>

<llo_original>
// kernel: mlp_forward.1
$region0: #{mlp_forward.1}
  #allocation0 [shape = 'u32[]', space=smem, size = 0x4, offset = 0x4, fixed_abs, tag = 'smem constant byte address 0x4 - core index']
  #allocation1 [shape = 'u32[144,128]{1,0:T(1,128)}', space=vmem, size = 0x12000, scoped, tag = 'internal scratch']
  %s0 = inlined_call_operand.vmem [shape: f32[16,784], index: 0, kind: input, shape index: {}]
  %s1 = inlined_call_operand.vmem [shape: bf16[784,256], index: 1, kind: input, shape index: {}]
  %s2 = inlined_call_operand.vmem [shape: f32[1,256], index: 2, kind: input, shape index: {}]
  %s3 = inlined_call_operand.hbm [shape: bf16[256,256], index: 3, kind: input, shape index: {}]
  %s4 = inlined_call_operand.vmem [shape: f32[1,256], index: 4, kind: input, shape index: {}]
  %s5 = inlined_call_operand.vmem [shape: bf16[256,128], index: 5, kind: input, shape index: {}]
  %s6 = inlined_call_operand.vmem [shape: f32[1,128], index: 6, kind: input, shape index: {}]
  %s7 = inlined_call_operand.vmem [shape: bf16[16,128], index: 7, kind: output, shape index: {}]
  %s8 = sld [smem:[#allocation0]]
  $region42: #{mlp_forward.1} parent=0
    _
  %s10 = ssub.s32 1, %s8
  %s11 = scalar_select 0, %s10, %s8
  $region1: #{mlp_forward.1} parent=0
    #allocation2 [shape = 'u8[131072]{0}', space=vmem, size = 0x20000, scoped, tag = 'input window, operand 3, single buffered']
    #allocation3 [shape = 's32[1]{0}', space=sflag, size = 0x4, scoped, tag = 'scoped memory for mlp_forward.1']
    %12 = vsyncpa [#allocation3], 0
    // Predicated region
    $region2: #{mlp_forward.1} parent=1 // pred_check
      _
    $region3: #{mlp_forward.1} parent=1 // pred_check_branch
      %14 = sbr.rel (0) target = $region5
    $region4: #{mlp_forward.1} parent=1 // pred_region
      _
    $region5: #{mlp_forward.1} parent=1 // pred_fallthru
      _
    // Predicated region
    $region6: #{mlp_forward.1} parent=1 // pred_check
      _
    $region7: #{mlp_forward.1} parent=1 // pred_check_branch
      %16 = sbr.rel (0) target = $region9
    $region8: #{mlp_forward.1} parent=1 // pred_region
      _
    $region9: #{mlp_forward.1} parent=1 // pred_fallthru
      _
    // Predicated region
    $region10: #{mlp_forward.1} parent=1 // pred_check
      _
    $region11: #{mlp_forward.1} parent=1 // pred_check_branch
      %18 = sbr.rel (0) target = $region13
    $region12: #{mlp_forward.1} parent=1 // pred_region
      _
    $region13: #{mlp_forward.1} parent=1 // pred_fallthru
      _
    // Predicated region
    $region14: #{mlp_forward.1} parent=1 // pred_check
      _
    $region15: #{mlp_forward.1} parent=1 // pred_check_branch
      %20 = sbr.rel (0) target = $region17
    $region16: #{mlp_forward.1} parent=1 // pred_region
      %s22 = ssub.s32 4096, 4096
      %23 = vsyncadd [#allocation3], %s22
      %s24 = sshll.u32 [#allocation2], 4
      %s25 = int_to_ptr.vmem [resolvable:$true] %s24
      %30 = dma.hbm_to_vmem [thread:$0]  %s3, 4096, %s25, [#allocation3], 128, 128, 8
    $region17: #{mlp_forward.1} parent=1 // pred_fallthru
      _
    // Predicated region
    $region18: #{mlp_forward.1} parent=1 // pred_check
      _
    $region19: #{mlp_forward.1} parent=1 // pred_check_branch
      %32 = sbr.rel (0) target = $region21
    $region20: #{mlp_forward.1} parent=1 // pred_region
      _
    $region21: #{mlp_forward.1} parent=1 // pred_fallthru
      _
    // Predicated region
    $region22: #{mlp_forward.1} parent=1 // pred_check
      _
    $region23: #{mlp_forward.1} parent=1 // pred_check_branch
      %34 = sbr.rel (0) target = $region25
    $region24: #{mlp_forward.1} parent=1 // pred_region
      _
    $region25: #{mlp_forward.1} parent=1 // pred_fallthru
      _
    // Predicated region
    $region26: #{mlp_forward.1} parent=1 // pred_check
      _
    $region27: #{mlp_forward.1} parent=1 // pred_check_branch
      %36 = sbr.rel (0) target = $region29
    $region28: #{mlp_forward.1} parent=1 // pred_region
      _
    $region29: #{mlp_forward.1} parent=1 // pred_fallthru
      _
    // Predicated region
    $region30: #{mlp_forward.1} parent=1 // pred_check
      _
    $region31: #{mlp_forward.1} parent=1 // pred_check_branch
      %38 = sbr.rel (0) target = $region33
    $region32: #{mlp_forward.1} parent=1 // pred_region
      %39 = dma.done [#allocation3], 4096
    $region33: #{mlp_forward.1} parent=1 // pred_fallthru
      _
    %v41 = vld [vmem:[%s0] sm:$0xff]
    %v42 = vld [vmem:[%s0 + $0x8] sm:$0xff]
    %v43 = vld [vmem:[%s0 + $0x10] sm:$0xff]
    %v44 = vld [vmem:[%s0 + $0x18] sm:$0xff]
    %v45 = vld [vmem:[%s0 + $0x20] sm:$0xff]
    %v46 = vld [vmem:[%s0 + $0x28] sm:$0xff]
    %v47 = vld [vmem:[%s0 + $0x30] sm:$0xff]
    %v48 = vld [vmem:[%s0 + $0x38] sm:$0xff]
    %v49 = vld [vmem:[%s0 + $0x40] sm:$0xff]
    %v50 = vld [vmem:[%s0 + $0x48] sm:$0xff]
    %v51 = vld [vmem:[%s0 + $0x50] sm:$0xff]
    %v52 = vld [vmem:[%s0 + $0x58] sm:$0xff]
    %v53 = vld [vmem:[%s0 + $0x60] sm:$0xff]
    %v54 = vld [vmem:[%s0 + $0x68] sm:$0xff]
    %v55 = vpack.c.bf16 %v48, %v41
    %v56 = vpack.c.bf16 %v49, %v42
    %v57 = vpack.c.bf16 %v50, %v43
    %v58 = vpack.c.bf16 %v51, %v44
    %v59 = vpack.c.bf16 %v52, %v45
    %v60 = vpack.c.bf16 %v53, %v46
    %v61 = vpack.c.bf16 %v54, %v47
    %v62 = vld [vmem:[%s1] sm:$0xff]
    %v63 = vld [vmem:[%s1 + $0x8] sm:$0xff]
    %v64 = vld [vmem:[%s1 + $0x10] sm:$0xff]
    %v65 = vld [vmem:[%s1 + $0x18] sm:$0xff]
    %v66 = vld [vmem:[%s1 + $0x20] sm:$0xff]
    %v67 = vld [vmem:[%s1 + $0x28] sm:$0xff]
    %v68 = vld [vmem:[%s1 + $0x30] sm:$0xff]
    %v69 = vld [vmem:[%s1 + $0x38] sm:$0xff]
    %v70 = vld [vmem:[%s1 + $0x40] sm:$0xff]
    %v71 = vld [vmem:[%s1 + $0x48] sm:$0xff]
    %v72 = vld [vmem:[%s1 + $0x50] sm:$0xff]
    %v73 = vld [vmem:[%s1 + $0x58] sm:$0xff]
    %v74 = vld [vmem:[%s1 + $0x60] sm:$0xff]
    %v75 = vld [vmem:[%s1 + $0x68] sm:$0xff]
    %v76 = vld [vmem:[%s1 + $0x70] sm:$0xff]
    %v77 = vld [vmem:[%s1 + $0x78] sm:$0xff]
    %v78 = vld [vmem:[%s1 + $0x80] sm:$0xff]
    %v79 = vld [vmem:[%s1 + $0x88] sm:$0xff]
    %v80 = vld [vmem:[%s1 + $0x90] sm:$0xff]
    %v81 = vld [vmem:[%s1 + $0x98] sm:$0xff]
    %v82 = vld [vmem:[%s1 + $0xa0] sm:$0xff]
    %v83 = vld [vmem:[%s1 + $0xa8] sm:$0xff]
    %v84 = vld [vmem:[%s1 + $0xb0] sm:$0xff]
    %v85 = vld [vmem:[%s1 + $0xb8] sm:$0xff]
    %v86 = vld [vmem:[%s1 + $0xc0] sm:$0xff]
    %v87 = vld [vmem:[%s1 + $0xc8] sm:$0xff]
    %v88 = vld [vmem:[%s1 + $0xd0] sm:$0xff]
    %v89 = vld [vmem:[%s1 + $0xd8] sm:$0xff]
    %v90 = vld [vmem:[%s1 + $0xe0] sm:$0xff]
    %v91 = vld [vmem:[%s1 + $0xe8] sm:$0xff]
    %v92 = vld [vmem:[%s1 + $0xf0] sm:$0xff]
    %v93 = vld [vmem:[%s1 + $0xf8] sm:$0xff]
    %v94 = vld [vmem:[%s1 + $0x100] sm:$0xff]
    %v95 = vld [vmem:[%s1 + $0x108] sm:$0xff]
    %v96 = vld [vmem:[%s1 + $0x110] sm:$0xff]
    %v97 = vld [vmem:[%s1 + $0x118] sm:$0xff]
    %v98 = vld [vmem:[%s1 + $0x120] sm:$0xff]
    %v99 = vld [vmem:[%s1 + $0x128] sm:$0xff]
    %v100 = vld [vmem:[%s1 + $0x130] sm:$0xff]
    %v101 = vld [vmem:[%s1 + $0x138] sm:$0xff]
    %v102 = vld [vmem:[%s1 + $0x140] sm:$0xff]
    %v103 = vld [vmem:[%s1 + $0x148] sm:$0xff]
    %v104 = vld [vmem:[%s1 + $0x150] sm:$0xff]
    %v105 = vld [vmem:[%s1 + $0x158] sm:$0xff]
    %v106 = vld [vmem:[%s1 + $0x160] sm:$0xff]
    %v107 = vld [vmem:[%s1 + $0x168] sm:$0xff]
    %v108 = vld [vmem:[%s1 + $0x170] sm:$0xff]
    %v109 = vld [vmem:[%s1 + $0x178] sm:$0xff]
    %v110 = vld [vmem:[%s1 + $0x180] sm:$0xff]
    %v111 = vld [vmem:[%s1 + $0x188] sm:$0xff]
    %v112 = vld [vmem:[%s1 + $0x190] sm:$0xff]
    %v113 = vld [vmem:[%s1 + $0x198] sm:$0xff]
    %v114 = vld [vmem:[%s1 + $0x1a0] sm:$0xff]
    %v115 = vld [vmem:[%s1 + $0x1a8] sm:$0xff]
    %v116 = vld [vmem:[%s1 + $0x1b0] sm:$0xff]
    %v117 = vld [vmem:[%s1 + $0x1b8] sm:$0xff]
    %v118 = vld [vmem:[%s1 + $0x1c0] sm:$0xff]
    %v119 = vld [vmem:[%s1 + $0x1c8] sm:$0xff]
    %v120 = vld [vmem:[%s1 + $0x1d0] sm:$0xff]
    %v121 = vld [vmem:[%s1 + $0x1d8] sm:$0xff]
    %v122 = vld [vmem:[%s1 + $0x1e0] sm:$0xff]
    %v123 = vld [vmem:[%s1 + $0x1e8] sm:$0xff]
    %v124 = vld [vmem:[%s1 + $0x1f0] sm:$0xff]
    %v125 = vld [vmem:[%s1 + $0x1f8] sm:$0xff]
    %v126 = vld [vmem:[%s1 + $0x200] sm:$0xff]
    %v127 = vld [vmem:[%s1 + $0x208] sm:$0xff]
    %v128 = vld [vmem:[%s1 + $0x210] sm:$0xff]
    %v129 = vld [vmem:[%s1 + $0x218] sm:$0xff]
    %v130 = vld [vmem:[%s1 + $0x220] sm:$0xff]
    %v131 = vld [vmem:[%s1 + $0x228] sm:$0xff]
    %v132 = vld [vmem:[%s1 + $0x230] sm:$0xff]
    %v133 = vld [vmem:[%s1 + $0x238] sm:$0xff]
    %v134 = vld [vmem:[%s1 + $0x240] sm:$0xff]
    %v135 = vld [vmem:[%s1 + $0x248] sm:$0xff]
    %v136 = vld [vmem:[%s1 + $0x250] sm:$0xff]
    %v137 = vld [vmem:[%s1 + $0x258] sm:$0xff]
    %v138 = vld [vmem:[%s1 + $0x260] sm:$0xff]
    %v139 = vld [vmem:[%s1 + $0x268] sm:$0xff]
    %v140 = vld [vmem:[%s1 + $0x270] sm:$0xff]
    %v141 = vld [vmem:[%s1 + $0x278] sm:$0xff]
    %v142 = vld [vmem:[%s1 + $0x280] sm:$0xff]
    %v143 = vld [vmem:[%s1 + $0x288] sm:$0xff]
    %v144 = vld [vmem:[%s1 + $0x290] sm:$0xff]
    %v145 = vld [vmem:[%s1 + $0x298] sm:$0xff]
    %v146 = vld [vmem:[%s1 + $0x2a0] sm:$0xff]
    %v147 = vld [vmem:[%s1 + $0x2a8] sm:$0xff]
    %v148 = vld [vmem:[%s1 + $0x2b0] sm:$0xff]
    %v149 = vld [vmem:[%s1 + $0x2b8] sm:$0xff]
    %v150 = vld [vmem:[%s1 + $0x2c0] sm:$0xff]
    %v151 = vld [vmem:[%s1 + $0x2c8] sm:$0xff]
    %v152 = vld [vmem:[%s1 + $0x2d0] sm:$0xff]
    %v153 = vld [vmem:[%s1 + $0x2d8] sm:$0xff]
    %v154 = vld [vmem:[%s1 + $0x2e0] sm:$0xff]
    %v155 = vld [vmem:[%s1 + $0x2e8] sm:$0xff]
    %v156 = vld [vmem:[%s1 + $0x2f0] sm:$0xff]
    %v157 = vld [vmem:[%s1 + $0x2f8] sm:$0xff]
    %v158 = vld [vmem:[%s1 + $0x300] sm:$0xff]
    %v159 = vld [vmem:[%s1 + $0x308] sm:$0xff]
    %v160 = vld [vmem:[%s2] sm:$0x3]
    %v162 = vlaneseq
    %v163 = vshrl.u32 %v162, 7
    %v164 = vsub.s32 0, %v163
    %v165 = vrot.slane %v160, %v164
    %v166 = vlaneseq
    %v167 = vshrl.u32 %v166, 7
    %v168 = vsub.s32 1, %v167
    %v169 = vrot.slane %v160, %v168
    %v270 = vunpack.c.l.b16 %v62
    %v271 = vunpack.c.h.b16 %v62
    %v272 = vunpack.c.l.b16 %v63
    %v273 = vunpack.c.h.b16 %v63
    %v274 = vunpack.c.l.b16 %v64
    %v275 = vunpack.c.h.b16 %v64
    %v276 = vunpack.c.l.b16 %v65
    %v277 = vunpack.c.h.b16 %v65
    %v278 = vunpack.c.l.b16 %v66
    %v279 = vunpack.c.h.b16 %v66
    %v280 = vunpack.c.l.b16 %v67
    %v281 = vunpack.c.h.b16 %v67
    %v282 = vunpack.c.l.b16 %v68
    %v283 = vunpack.c.h.b16 %v68
    %v284 = vunpack.c.l.b16 %v69
    %v285 = vunpack.c.h.b16 %v69
    %v286 = vunpack.c.l.b16 %v70
    %v287 = vunpack.c.h.b16 %v70
    %v288 = vunpack.c.l.b16 %v71
    %v289 = vunpack.c.h.b16 %v71
    %v290 = vunpack.c.l.b16 %v72
    %v291 = vunpack.c.h.b16 %v72
    %v292 = vunpack.c.l.b16 %v73
    %v293 = vunpack.c.h.b16 %v73
    %v294 = vunpack.c.l.b16 %v74
    %v295 = vunpack.c.h.b16 %v74
    %v296 = vunpack.c.l.b16 %v75
    %v297 = vunpack.c.h.b16 %v75
    %v298 = vunpack.c.l.b16 %v76
    %v299 = vunpack.c.h.b16 %v76
    %v300 = vunpack.c.l.b16 %v77
    %v301 = vunpack.c.h.b16 %v77
    %v302 = vunpack.c.l.b16 %v78
    %v303 = vunpack.c.h.b16 %v78
    %v304 = vunpack.c.l.b16 %v79
    %v305 = vunpack.c.h.b16 %v79
    %v306 = vunpack.c.l.b16 %v80
    %v307 = vunpack.c.h.b16 %v80
    %v308 = vunpack.c.l.b16 %v81
    %v309 = vunpack.c.h.b16 %v81
    %v310 = vunpack.c.l.b16 %v82
    %v311 = vunpack.c.h.b16 %v82
    %v312 = vunpack.c.l.b16 %v83
    %v313 = vunpack.c.h.b16 %v83
    %v314 = vunpack.c.l.b16 %v84
    %v315 = vunpack.c.h.b16 %v84
    %v316 = vunpack.c.l.b16 %v85
    %v317 = vunpack.c.h.b16 %v85
    %v318 = vunpack.c.l.b16 %v86
    %v319 = vunpack.c.h.b16 %v86
    %v320 = vunpack.c.l.b16 %v87
    %v321 = vunpack.c.h.b16 %v87
    %v322 = vunpack.c.l.b16 %v88
    %v323 = vunpack.c.h.b16 %v88
    %v324 = vunpack.c.l.b16 %v89
    %v325 = vunpack.c.h.b16 %v89
    %v326 = vunpack.c.l.b16 %v90
    %v327 = vunpack.c.h.b16 %v90
    %v328 = vunpack.c.l.b16 %v91
    %v329 = vunpack.c.h.b16 %v91
    %v330 = vunpack.c.l.b16 %v92
    %v331 = vunpack.c.h.b16 %v92
    %v332 = vunpack.c.l.b16 %v93
    %v333 = vunpack.c.h.b16 %v93
    %v334 = vunpack.c.l.b16 %v94
    %v335 = vunpack.c.h.b16 %v94
    %v336 = vunpack.c.l.b16 %v95
    %v337 = vunpack.c.h.b16 %v95
    %v338 = vunpack.c.l.b16 %v96
    %v339 = vunpack.c.h.b16 %v96
    %v340 = vunpack.c.l.b16 %v97
    %v341 = vunpack.c.h.b16 %v97
    %v342 = vunpack.c.l.b16 %v98
    %v343 = vunpack.c.h.b16 %v98
    %v344 = vunpack.c.l.b16 %v99
    %v345 = vunpack.c.h.b16 %v99
    %v346 = vunpack.c.l.b16 %v100
    %v347 = vunpack.c.h.b16 %v100
    %v348 = vunpack.c.l.b16 %v101
    %v349 = vunpack.c.h.b16 %v101
    %v350 = vunpack.c.l.b16 %v102
    %v351 = vunpack.c.h.b16 %v102
    %v352 = vunpack.c.l.b16 %v103
    %v353 = vunpack.c.h.b16 %v103
    %v354 = vunpack.c.l.b16 %v104
    %v355 = vunpack.c.h.b16 %v104
    %v356 = vunpack.c.l.b16 %v105
    %v357 = vunpack.c.h.b16 %v105
    %v358 = vunpack.c.l.b16 %v106
    %v359 = vunpack.c.h.b16 %v106
    %v360 = vunpack.c.l.b16 %v107
    %v361 = vunpack.c.h.b16 %v107
    %v362 = vunpack.c.l.b16 %v108
    %v363 = vunpack.c.h.b16 %v108
    %v364 = vunpack.c.l.b16 %v109
    %v365 = vunpack.c.h.b16 %v109
    %v366 = vunpack.c.l.b16 %v110
    %v367 = vunpack.c.h.b16 %v110
    %v368 = vunpack.c.l.b16 %v111
    %v369 = vunpack.c.h.b16 %v111
    %v370 = vunpack.c.l.b16 %v112
    %v371 = vunpack.c.h.b16 %v112
    %v372 = vunpack.c.l.b16 %v113
    %v373 = vunpack.c.h.b16 %v113
    %v374 = vunpack.c.l.b16 %v114
    %v375 = vunpack.c.h.b16 %v114
    %v376 = vunpack.c.l.b16 %v115
    %v377 = vunpack.c.h.b16 %v115
    %v378 = vunpack.c.l.b16 %v116
    %v379 = vunpack.c.h.b16 %v116
    %v380 = vunpack.c.l.b16 %v117
    %v381 = vunpack.c.h.b16 %v117
    %v382 = vunpack.c.l.b16 %v118
    %v383 = vunpack.c.h.b16 %v118
    %v384 = vunpack.c.l.b16 %v119
    %v385 = vunpack.c.h.b16 %v119
    %v386 = vunpack.c.l.b16 %v120
    %v387 = vunpack.c.h.b16 %v120
    %v388 = vunpack.c.l.b16 %v121
    %v389 = vunpack.c.h.b16 %v121
    %v390 = vunpack.c.l.b16 %v122
    %v391 = vunpack.c.h.b16 %v122
    %v392 = vunpack.c.l.b16 %v123
    %v393 = vunpack.c.h.b16 %v123
    %v394 = vunpack.c.l.b16 %v124
    %v395 = vunpack.c.h.b16 %v124
    %v396 = vunpack.c.l.b16 %v125
    %v397 = vunpack.c.h.b16 %v125
    %v398 = vunpack.c.l.b16 %v126
    %v399 = vunpack.c.h.b16 %v126
    %v400 = vunpack.c.l.b16 %v127
    %v401 = vunpack.c.h.b16 %v127
    %v402 = vunpack.c.l.b16 %v128
    %v403 = vunpack.c.h.b16 %v128
    %v404 = vunpack.c.l.b16 %v129
    %v405 = vunpack.c.h.b16 %v129
    %v406 = vunpack.c.l.b16 %v130
    %v407 = vunpack.c.h.b16 %v130
    %v408 = vunpack.c.l.b16 %v131
    %v409 = vunpack.c.h.b16 %v131
    %v410 = vunpack.c.l.b16 %v132
    %v411 = vunpack.c.h.b16 %v132
    %v412 = vunpack.c.l.b16 %v133
    %v413 = vunpack.c.h.b16 %v133
    %v414 = vunpack.c.l.b16 %v134
    %v415 = vunpack.c.h.b16 %v134
    %v416 = vunpack.c.l.b16 %v135
    %v417 = vunpack.c.h.b16 %v135
    %v418 = vunpack.c.l.b16 %v136
    %v419 = vunpack.c.h.b16 %v136
    %v420 = vunpack.c.l.b16 %v137
    %v421 = vunpack.c.h.b16 %v137
    %v422 = vunpack.c.l.b16 %v138
    %v423 = vunpack.c.h.b16 %v138
    %v424 = vunpack.c.l.b16 %v139
    %v425 = vunpack.c.h.b16 %v139
    %v426 = vunpack.c.l.b16 %v140
    %v427 = vunpack.c.h.b16 %v140
    %v428 = vunpack.c.l.b16 %v141
    %v429 = vunpack.c.h.b16 %v141
    %v430 = vunpack.c.l.b16 %v142
    %v431 = vunpack.c.h.b16 %v142
    %v432 = vunpack.c.l.b16 %v143
    %v433 = vunpack.c.h.b16 %v143
    %v434 = vunpack.c.l.b16 %v144
    %v435 = vunpack.c.h.b16 %v144
    %v436 = vunpack.c.l.b16 %v145
    %v437 = vunpack.c.h.b16 %v145
    %v438 = vunpack.c.l.b16 %v146
    %v439 = vunpack.c.h.b16 %v146
    %v440 = vunpack.c.l.b16 %v147
    %v441 = vunpack.c.h.b16 %v147
    %v442 = vunpack.c.l.b16 %v148
    %v443 = vunpack.c.h.b16 %v148
    %v444 = vunpack.c.l.b16 %v149
    %v445 = vunpack.c.h.b16 %v149
    %v446 = vunpack.c.l.b16 %v150
    %v447 = vunpack.c.h.b16 %v150
    %v448 = vunpack.c.l.b16 %v151
    %v449 = vunpack.c.h.b16 %v151
    %v450 = vunpack.c.l.b16 %v152
    %v451 = vunpack.c.h.b16 %v152
    %v452 = vunpack.c.l.b16 %v153
    %v453 = vunpack.c.h.b16 %v153
    %v454 = vunpack.c.l.b16 %v154
    %v455 = vunpack.c.h.b16 %v154
    %v456 = vunpack.c.l.b16 %v155
    %v457 = vunpack.c.h.b16 %v155
    %v458 = vunpack.c.l.b16 %v156
    %v459 = vunpack.c.h.b16 %v156
    %v460 = vunpack.c.l.b16 %v157
    %v461 = vunpack.c.h.b16 %v157
    %v462 = vunpack.c.l.b16 %v158
    %v463 = vunpack.c.h.b16 %v158
    %v464 = vunpack.c.l.b16 %v159
    %v465 = vunpack.c.h.b16 %v159
    %v466 = vpack.c.b16 %v272, %v270
    %v467 = vpack.c.b16 %v273, %v271
    %v468 = vpack.c.b16 %v276, %v274
    %v469 = vpack.c.b16 %v277, %v275
    %v470 = vpack.c.b16 %v280, %v278
    %v471 = vpack.c.b16 %v281, %v279
    %v472 = vpack.c.b16 %v284, %v282
    %v473 = vpack.c.b16 %v285, %v283
    %v474 = vpack.c.b16 %v288, %v286
    %v475 = vpack.c.b16 %v289, %v287
    %v476 = vpack.c.b16 %v292, %v290
    %v477 = vpack.c.b16 %v293, %v291
    %v478 = vpack.c.b16 %v296, %v294
    %v479 = vpack.c.b16 %v297, %v295
    %v480 = vpack.c.b16 %v300, %v298
    %v481 = vpack.c.b16 %v301, %v299
    %v482 = vpack.c.b16 %v304, %v302
    %v483 = vpack.c.b16 %v305, %v303
    %v484 = vpack.c.b16 %v308, %v306
    %v485 = vpack.c.b16 %v309, %v307
    %v486 = vpack.c.b16 %v312, %v310
    %v487 = vpack.c.b16 %v313, %v311
    %v488 = vpack.c.b16 %v316, %v314
    %v489 = vpack.c.b16 %v317, %v315
    %v490 = vpack.c.b16 %v320, %v318
    %v491 = vpack.c.b16 %v321, %v319
    %v492 = vpack.c.b16 %v324, %v322
    %v493 = vpack.c.b16 %v325, %v323
    %v494 = vpack.c.b16 %v328, %v326
    %v495 = vpack.c.b16 %v329, %v327
    %v496 = vpack.c.b16 %v332, %v330
    %v497 = vpack.c.b16 %v333, %v331
    %v498 = vpack.c.b16 %v336, %v334
    %v499 = vpack.c.b16 %v337, %v335
    %v500 = vpack.c.b16 %v340, %v338
    %v501 = vpack.c.b16 %v341, %v339
    %v502 = vpack.c.b16 %v344, %v342
    %v503 = vpack.c.b16 %v345, %v343
    %v504 = vpack.c.b16 %v348, %v346
    %v505 = vpack.c.b16 %v349, %v347
    %v506 = vpack.c.b16 %v352, %v350
    %v507 = vpack.c.b16 %v353, %v351
    %v508 = vpack.c.b16 %v356, %v354
    %v509 = vpack.c.b16 %v357, %v355
    %v510 = vpack.c.b16 %v360, %v358
    %v511 = vpack.c.b16 %v361, %v359
    %v512 = vpack.c.b16 %v364, %v362
    %v513 = vpack.c.b16 %v365, %v363
    %v514 = vpack.c.b16 %v368, %v366
    %v515 = vpack.c.b16 %v369, %v367
    %v516 = vpack.c.b16 %v372, %v370
    %v517 = vpack.c.b16 %v373, %v371
    %v518 = vpack.c.b16 %v376, %v374
    %v519 = vpack.c.b16 %v377, %v375
    %v520 = vpack.c.b16 %v380, %v378
    %v521 = vpack.c.b16 %v381, %v379
    %v522 = vpack.c.b16 %v384, %v382
    %v523 = vpack.c.b16 %v385, %v383
    %v524 = vpack.c.b16 %v388, %v386
    %v525 = vpack.c.b16 %v389, %v387
    %v526 = vpack.c.b16 %v392, %v390
    %v527 = vpack.c.b16 %v393, %v391
    %v528 = vpack.c.b16 %v396, %v394
    %v529 = vpack.c.b16 %v397, %v395
    %v530 = vpack.c.b16 %v400, %v398
    %v531 = vpack.c.b16 %v401, %v399
    %v532 = vpack.c.b16 %v404, %v402
    %v533 = vpack.c.b16 %v405, %v403
    %v534 = vpack.c.b16 %v408, %v406
    %v535 = vpack.c.b16 %v409, %v407
    %v536 = vpack.c.b16 %v412, %v410
    %v537 = vpack.c.b16 %v413, %v411
    %v538 = vpack.c.b16 %v416, %v414
    %v539 = vpack.c.b16 %v417, %v415
    %v540 = vpack.c.b16 %v420, %v418
    %v541 = vpack.c.b16 %v421, %v419
    %v542 = vpack.c.b16 %v424, %v422
    %v543 = vpack.c.b16 %v425, %v423
    %v544 = vpack.c.b16 %v428, %v426
    %v545 = vpack.c.b16 %v429, %v427
    %v546 = vpack.c.b16 %v432, %v430
    %v547 = vpack.c.b16 %v433, %v431
    %v548 = vpack.c.b16 %v436, %v434
    %v549 = vpack.c.b16 %v437, %v435
    %v550 = vpack.c.b16 %v440, %v438
    %v551 = vpack.c.b16 %v441, %v439
    %v552 = vpack.c.b16 %v444, %v442
    %v553 = vpack.c.b16 %v445, %v443
    %v554 = vpack.c.b16 %v448, %v446
    %v555 = vpack.c.b16 %v449, %v447
    %v556 = vpack.c.b16 %v452, %v450
    %v557 = vpack.c.b16 %v453, %v451
    %v558 = vpack.c.b16 %v456, %v454
    %v559 = vpack.c.b16 %v457, %v455
    %v560 = vpack.c.b16 %v460, %v458
    %v561 = vpack.c.b16 %v461, %v459
    %v562 = vpack.c.b16 %v464, %v462
    %v563 = vpack.c.b16 %v465, %v463
    %vm662 = vcmask 130048
    %v664 = vsel %vm662, %v61, 0
    %666 = vmatprep.subr.bf16.mxu0 %v467
    %667 = vmatpush1.bf16.msra.mxu0 %v466
    %668 = vmatprep.subr.bf16.mxu0 %v469
    %669 = vmatpush1.bf16.msra.mxu0 %v468
    %670 = vmatprep.subr.bf16.mxu0 %v471
    %671 = vmatpush1.bf16.msra.mxu0 %v470
    %672 = vmatprep.subr.bf16.mxu0 %v473
    %673 = vmatpush1.bf16.msra.mxu0 %v472
    %674 = vmatprep.subr.bf16.mxu0 %v475
    %675 = vmatpush1.bf16.msra.mxu0 %v474
    %676 = vmatprep.subr.bf16.mxu0 %v477
    %677 = vmatpush1.bf16.msra.mxu0 %v476
    %678 = vmatprep.subr.bf16.mxu0 %v479
    %679 = vmatpush1.bf16.msra.mxu0 %v478
    %680 = vmatprep.subr.bf16.mxu0 %v481
    %681 = vmatpush1.bf16.msra.mxu0 %v480
    %682 = vmatprep.subr.bf16.mxu0 %v483
    %683 = vmatpush1.bf16.msra.mxu0 %v482
    %684 = vmatprep.subr.bf16.mxu0 %v485
    %685 = vmatpush1.bf16.msra.mxu0 %v484
    %686 = vmatprep.subr.bf16.mxu0 %v487
    %687 = vmatpush1.bf16.msra.mxu0 %v486
    %688 = vmatprep.subr.bf16.mxu0 %v489
    %689 = vmatpush1.bf16.msra.mxu0 %v488
    %690 = vmatprep.subr.bf16.mxu0 %v491
    %691 = vmatpush1.bf16.msra.mxu0 %v490
    %692 = vmatprep.subr.bf16.mxu0 %v493
    %693 = vmatpush1.bf16.msra.mxu0 %v492
    %694 = vmatprep.subr.bf16.mxu0 %v495
    %695 = vmatpush1.bf16.msra.mxu0 %v494
    %696 = vmatprep.subr.bf16.mxu0 %v497
    %697 = vmatpush1.bf16.msra.mxu0 %v496
    %698 = vmatprep.mubr.bf16.mxu0 %v56
    %699 = vmatmul.mubr.bf16.gmra.mrb[0].mxu0 %v55
    %v700 = vpop.f32.mrb[0].mxu0
    %v701 = vadd.f32 %v165, %v700
    %v702 = vpop.f32.mrb[0].mxu0
    %v703 = vadd.f32 %v169, %v702
    %v704 = vpop.f32.mrb[0].mxu0
    %v705 = vadd.f32 %v165, %v704
    %v706 = vpop.f32.mrb[0].mxu0
    %v707 = vadd.f32 %v169, %v706
    %708 = vdwg.mxu0
    %709 = vmatprep.subr.bf16.mxu0 %v499
    %710 = vmatpush1.bf16.msra.mxu0 %v498
    %711 = vmatprep.subr.bf16.mxu0 %v501
    %712 = vmatpush1.bf16.msra.mxu0 %v500
    %713 = vmatprep.subr.bf16.mxu0 %v503
    %714 = vmatpush1.bf16.msra.mxu0 %v502
    %715 = vmatprep.subr.bf16.mxu0 %v505
    %716 = vmatpush1.bf16.msra.mxu0 %v504
    %717 = vmatprep.subr.bf16.mxu0 %v507
    %718 = vmatpush1.bf16.msra.mxu0 %v506
    %719 = vmatprep.subr.bf16.mxu0 %v509
    %720 = vmatpush1.bf16.msra.mxu0 %v508
    %721 = vmatprep.subr.bf16.mxu0 %v511
    %722 = vmatpush1.bf16.msra.mxu0 %v510
    %723 = vmatprep.subr.bf16.mxu0 %v513
    %724 = vmatpush1.bf16.msra.mxu0 %v512
    %725 = vmatprep.subr.bf16.mxu0 %v515
    %726 = vmatpush1.bf16.msra.mxu0 %v514
    %727 = vmatprep.subr.bf16.mxu0 %v517
    %728 = vmatpush1.bf16.msra.mxu0 %v516
    %729 = vmatprep.subr.bf16.mxu0 %v519
    %730 = vmatpush1.bf16.msra.mxu0 %v518
    %731 = vmatprep.subr.bf16.mxu0 %v521
    %732 = vmatpush1.bf16.msra.mxu0 %v520
    %733 = vmatprep.subr.bf16.mxu0 %v523
    %734 = vmatpush1.bf16.msra.mxu0 %v522
    %735 = vmatprep.subr.bf16.mxu0 %v525
    %736 = vmatpush1.bf16.msra.mxu0 %v524
    %737 = vmatprep.subr.bf16.mxu0 %v527
    %738 = vmatpush1.bf16.msra.mxu0 %v526
    %739 = vmatprep.subr.bf16.mxu0 %v529
    %740 = vmatpush1.bf16.msra.mxu0 %v528
    %741 = vmatprep.mubr.bf16.mxu0 %v58
    %742 = vmatmul.mubr.bf16.gmra.mrb[0].mxu0 %v57
    %v743 = vpop.f32.mrb[0].mxu0
    %v744 = vadd.f32 %v701, %v743
    %v745 = vpop.f32.mrb[0].mxu0
    %v746 = vadd.f32 %v703, %v745
    %v747 = vpop.f32.mrb[0].mxu0
    %v748 = vadd.f32 %v705, %v747
    %v749 = vpop.f32.mrb[0].mxu0
    %v750 = vadd.f32 %v707, %v749
    %751 = vdwg.mxu0
    %752 = vmatprep.subr.bf16.mxu0 %v531
    %753 = vmatpush1.bf16.msra.mxu0 %v530
    %754 = vmatprep.subr.bf16.mxu0 %v533
    %755 = vmatpush1.bf16.msra.mxu0 %v532
    %756 = vmatprep.subr.bf16.mxu0 %v535
    %757 = vmatpush1.bf16.msra.mxu0 %v534
    %758 = vmatprep.subr.bf16.mxu0 %v537
    %759 = vmatpush1.bf16.msra.mxu0 %v536
    %760 = vmatprep.subr.bf16.mxu0 %v539
    %761 = vmatpush1.bf16.msra.mxu0 %v538
    %762 = vmatprep.subr.bf16.mxu0 %v541
    %763 = vmatpush1.bf16.msra.mxu0 %v540
    %764 = vmatprep.subr.bf16.mxu0 %v543
    %765 = vmatpush1.bf16.msra.mxu0 %v542
    %766 = vmatprep.subr.bf16.mxu0 %v545
    %767 = vmatpush1.bf16.msra.mxu0 %v544
    %768 = vmatprep.subr.bf16.mxu0 %v547
    %769 = vmatpush1.bf16.msra.mxu0 %v546
    %770 = vmatprep.subr.bf16.mxu0 %v549
    %771 = vmatpush1.bf16.msra.mxu0 %v548
    %772 = vmatprep.subr.bf16.mxu0 %v551
    %773 = vmatpush1.bf16.msra.mxu0 %v550
    %774 = vmatprep.subr.bf16.mxu0 %v553
    %775 = vmatpush1.bf16.msra.mxu0 %v552
    %776 = vmatprep.subr.bf16.mxu0 %v555
    %777 = vmatpush1.bf16.msra.mxu0 %v554
    %778 = vmatprep.subr.bf16.mxu0 %v557
    %779 = vmatpush1.bf16.msra.mxu0 %v556
    %780 = vmatprep.subr.bf16.mxu0 %v559
    %781 = vmatpush1.bf16.msra.mxu0 %v558
    %782 = vmatprep.subr.bf16.mxu0 %v561
    %783 = vmatpush1.bf16.msra.mxu0 %v560
    %784 = vmatprep.mubr.bf16.mxu0 %v60
    %785 = vmatmul.mubr.bf16.gmra.mrb[0].mxu0 %v59
    %v786 = vpop.f32.mrb[0].mxu0
    %v787 = vadd.f32 %v744, %v786
    %v788 = vpop.f32.mrb[0].mxu0
    %v789 = vadd.f32 %v746, %v788
    %v790 = vpop.f32.mrb[0].mxu0
    %v791 = vadd.f32 %v748, %v790
    %v792 = vpop.f32.mrb[0].mxu0
    %v793 = vadd.f32 %v750, %v792
    %794 = vdwg.mxu0
    %795 = vmatprep.subr.bf16.mxu0 %v563
    %796 = vmatpush1.bf16.msra.mxu0 %v562
    %797 = vmatprep.subr.bf16.mxu0 0
    %798 = vmatpush1.bf16.msra.mxu0 0
    %799 = vmatprep.subr.bf16.mxu0 0
    %800 = vmatpush1.bf16.msra.mxu0 0
    %801 = vmatprep.subr.bf16.mxu0 0
    %802 = vmatpush1.bf16.msra.mxu0 0
    %803 = vmatprep.subr.bf16.mxu0 0
    %804 = vmatpush1.bf16.msra.mxu0 0
    %805 = vmatprep.subr.bf16.mxu0 0
    %806 = vmatpush1.bf16.msra.mxu0 0
    %807 = vmatprep.subr.bf16.mxu0 0
    %808 = vmatpush1.bf16.msra.mxu0 0
    %809 = vmatprep.subr.bf16.mxu0 0
    %810 = vmatpush1.bf16.msra.mxu0 0
    %811 = vmatprep.subr.bf16.mxu0 0
    %812 = vmatpush1.bf16.msra.mxu0 0
    %813 = vmatprep.subr.bf16.mxu0 0
    %814 = vmatpush1.bf16.msra.mxu0 0
    %815 = vmatprep.subr.bf16.mxu0 0
    %816 = vmatpush1.bf16.msra.mxu0 0
    %817 = vmatprep.subr.bf16.mxu0 0
    %818 = vmatpush1.bf16.msra.mxu0 0
    %819 = vmatprep.subr.bf16.mxu0 0
    %820 = vmatpush1.bf16.msra.mxu0 0
    %821 = vmatprep.subr.bf16.mxu0 0
    %822 = vmatpush1.bf16.msra.mxu0 0
    %823 = vmatprep.subr.bf16.mxu0 0
    %824 = vmatpush1.bf16.msra.mxu0 0
    %825 = vmatprep.subr.bf16.mxu0 0
    %826 = vmatpush1.bf16.msra.mxu0 0
    %827 = vmatprep.mubr.bf16.mxu0 0
    %828 = vmatmul.mubr.bf16.gmra.mrb[0].mxu0 %v664
    %v829 = vpop.f32.mrb[0].mxu0
    %v830 = vadd.f32 %v787, %v829
    %v831 = vpop.f32.mrb[0].mxu0
    %v832 = vadd.f32 %v789, %v831
    %v833 = vpop.f32.mrb[0].mxu0
    %v834 = vadd.f32 %v791, %v833
    %v835 = vpop.f32.mrb[0].mxu0
    %v836 = vadd.f32 %v793, %v835
    %837 = vdwg.mxu0
    %v838 = vmax.f32 %v830, 0.0
    %v839 = vmax.f32 %v832, 0.0
    %v840 = vmax.f32 %v834, 0.0
    %v841 = vmax.f32 %v836, 0.0
    %v842 = vpack.c.bf16 %v840, %v838
    %v843 = vpack.c.bf16 %v841, %v839
    %v844 = vld [vmem:[#allocation2] sm:$0xff]
    %v845 = vld [vmem:[#allocation2 + $0x8] sm:$0xff]
    %v846 = vld [vmem:[#allocation2 + $0x10] sm:$0xff]
    %v847 = vld [vmem:[#allocation2 + $0x18] sm:$0xff]
    %v848 = vld [vmem:[#allocation2 + $0x20] sm:$0xff]
    %v849 = vld [vmem:[#allocation2 + $0x28] sm:$0xff]
    %v850 = vld [vmem:[#allocation2 + $0x30] sm:$0xff]
    %v851 = vld [vmem:[#allocation2 + $0x38] sm:$0xff]
    %v852 = vld [vmem:[#allocation2 + $0x40] sm:$0xff]
    %v853 = vld [vmem:[#allocation2 + $0x48] sm:$0xff]
    %v854 = vld [vmem:[#allocation2 + $0x50] sm:$0xff]
    %v855 = vld [vmem:[#allocation2 + $0x58] sm:$0xff]
    %v856 = vld [vmem:[#allocation2 + $0x60] sm:$0xff]
    %v857 = vld [vmem:[#allocation2 + $0x68] sm:$0xff]
    %v858 = vld [vmem:[#allocation2 + $0x70] sm:$0xff]
    %v859 = vld [vmem:[#allocation2 + $0x78] sm:$0xff]
    %v860 = vld [vmem:[#allocation2 + $0x80] sm:$0xff]
    %v861 = vld [vmem:[#allocation2 + $0x88] sm:$0xff]
    %v862 = vld [vmem:[#allocation2 + $0x90] sm:$0xff]
    %v863 = vld [vmem:[#allocation2 + $0x98] sm:$0xff]
    %v864 = vld [vmem:[#allocation2 + $0xa0] sm:$0xff]
    %v865 = vld [vmem:[#allocation2 + $0xa8] sm:$0xff]
    %v866 = vld [vmem:[#allocation2 + $0xb0] sm:$0xff]
    %v867 = vld [vmem:[#allocation2 + $0xb8] sm:$0xff]
    %v868 = vld [vmem:[#allocation2 + $0xc0] sm:$0xff]
    %v869 = vld [vmem:[#allocation2 + $0xc8] sm:$0xff]
    %v870 = vld [vmem:[#allocation2 + $0xd0] sm:$0xff]
    %v871 = vld [vmem:[#allocation2 + $0xd8] sm:$0xff]
    %v872 = vld [vmem:[#allocation2 + $0xe0] sm:$0xff]
    %v873 = vld [vmem:[#allocation2 + $0xe8] sm:$0xff]
    %v874 = vld [vmem:[#allocation2 + $0xf0] sm:$0xff]
    %v875 = vld [vmem:[#allocation2 + $0xf8] sm:$0xff]
    %v876 = vld [vmem:[%s4] sm:$0x3]
    %v878 = vlaneseq
    %v879 = vshrl.u32 %v878, 7
    %v880 = vsub.s32 0, %v879
    %v881 = vrot.slane %v876, %v880
    %v882 = vlaneseq
    %v883 = vshrl.u32 %v882, 7
    %v884 = vsub.s32 1, %v883
    %v885 = vrot.slane %v876, %v884
    %v920 = vunpack.c.l.b16 %v844
    %v921 = vunpack.c.h.b16 %v844
    %v922 = vunpack.c.l.b16 %v845
    %v923 = vunpack.c.h.b16 %v845
    %v924 = vunpack.c.l.b16 %v846
    %v925 = vunpack.c.h.b16 %v846
    %v926 = vunpack.c.l.b16 %v847
    %v927 = vunpack.c.h.b16 %v847
    %v928 = vunpack.c.l.b16 %v848
    %v929 = vunpack.c.h.b16 %v848
    %v930 = vunpack.c.l.b16 %v849
    %v931 = vunpack.c.h.b16 %v849
    %v932 = vunpack.c.l.b16 %v850
    %v933 = vunpack.c.h.b16 %v850
    %v934 = vunpack.c.l.b16 %v851
    %v935 = vunpack.c.h.b16 %v851
    %v936 = vunpack.c.l.b16 %v852
    %v937 = vunpack.c.h.b16 %v852
    %v938 = vunpack.c.l.b16 %v853
    %v939 = vunpack.c.h.b16 %v853
    %v940 = vunpack.c.l.b16 %v854
    %v941 = vunpack.c.h.b16 %v854
    %v942 = vunpack.c.l.b16 %v855
    %v943 = vunpack.c.h.b16 %v855
    %v944 = vunpack.c.l.b16 %v856
    %v945 = vunpack.c.h.b16 %v856
    %v946 = vunpack.c.l.b16 %v857
    %v947 = vunpack.c.h.b16 %v857
    %v948 = vunpack.c.l.b16 %v858
    %v949 = vunpack.c.h.b16 %v858
    %v950 = vunpack.c.l.b16 %v859
    %v951 = vunpack.c.h.b16 %v859
    %v952 = vunpack.c.l.b16 %v860
    %v953 = vunpack.c.h.b16 %v860
    %v954 = vunpack.c.l.b16 %v861
    %v955 = vunpack.c.h.b16 %v861
    %v956 = vunpack.c.l.b16 %v862
    %v957 = vunpack.c.h.b16 %v862
    %v958 = vunpack.c.l.b16 %v863
    %v959 = vunpack.c.h.b16 %v863
    %v960 = vunpack.c.l.b16 %v864
    %v961 = vunpack.c.h.b16 %v864
    %v962 = vunpack.c.l.b16 %v865
    %v963 = vunpack.c.h.b16 %v865
    %v964 = vunpack.c.l.b16 %v866
    %v965 = vunpack.c.h.b16 %v866
    %v966 = vunpack.c.l.b16 %v867
    %v967 = vunpack.c.h.b16 %v867
    %v968 = vunpack.c.l.b16 %v868
    %v969 = vunpack.c.h.b16 %v868
    %v970 = vunpack.c.l.b16 %v869
    %v971 = vunpack.c.h.b16 %v869
    %v972 = vunpack.c.l.b16 %v870
    %v973 = vunpack.c.h.b16 %v870
    %v974 = vunpack.c.l.b16 %v871
    %v975 = vunpack.c.h.b16 %v871
    %v976 = vunpack.c.l.b16 %v872
    %v977 = vunpack.c.h.b16 %v872
    %v978 = vunpack.c.l.b16 %v873
    %v979 = vunpack.c.h.b16 %v873
    %v980 = vunpack.c.l.b16 %v874
    %v981 = vunpack.c.h.b16 %v874
    %v982 = vunpack.c.l.b16 %v875
    %v983 = vunpack.c.h.b16 %v875
    %v984 = vpack.c.b16 %v922, %v920
    %v985 = vpack.c.b16 %v923, %v921
    %v986 = vpack.c.b16 %v926, %v924
    %v987 = vpack.c.b16 %v927, %v925
    %v988 = vpack.c.b16 %v930, %v928
    %v989 = vpack.c.b16 %v931, %v929
    %v990 = vpack.c.b16 %v934, %v932
    %v991 = vpack.c.b16 %v935, %v933
    %v992 = vpack.c.b16 %v938, %v936
    %v993 = vpack.c.b16 %v939, %v937
    %v994 = vpack.c.b16 %v942, %v940
    %v995 = vpack.c.b16 %v943, %v941
    %v996 = vpack.c.b16 %v946, %v944
    %v997 = vpack.c.b16 %v947, %v945
    %v998 = vpack.c.b16 %v950, %v948
    %v999 = vpack.c.b16 %v951, %v949
    %v1000 = vpack.c.b16 %v954, %v952
    %v1001 = vpack.c.b16 %v955, %v953
    %v1002 = vpack.c.b16 %v958, %v956
    %v1003 = vpack.c.b16 %v959, %v957
    %v1004 = vpack.c.b16 %v962, %v960
    %v1005 = vpack.c.b16 %v963, %v961
    %v1006 = vpack.c.b16 %v966, %v964
    %v1007 = vpack.c.b16 %v967, %v965
    %v1008 = vpack.c.b16 %v970, %v968
    %v1009 = vpack.c.b16 %v971, %v969
    %v1010 = vpack.c.b16 %v974, %v972
    %v1011 = vpack.c.b16 %v975, %v973
    %v1012 = vpack.c.b16 %v978, %v976
    %v1013 = vpack.c.b16 %v979, %v977
    %v1014 = vpack.c.b16 %v982, %v980
    %v1015 = vpack.c.b16 %v983, %v981
    %1048 = vmatprep.subr.bf16.mxu0 %v985
    %1049 = vmatpush1.bf16.msra.mxu0 %v984
    %1050 = vmatprep.subr.bf16.mxu0 %v987
    %1051 = vmatpush1.bf16.msra.mxu0 %v986
    %1052 = vmatprep.subr.bf16.mxu0 %v989
    %1053 = vmatpush1.bf16.msra.mxu0 %v988
    %1054 = vmatprep.subr.bf16.mxu0 %v991
    %1055 = vmatpush1.bf16.msra.mxu0 %v990
    %1056 = vmatprep.subr.bf16.mxu0 %v993
    %1057 = vmatpush1.bf16.msra.mxu0 %v992
    %1058 = vmatprep.subr.bf16.mxu0 %v995
    %1059 = vmatpush1.bf16.msra.mxu0 %v994
    %1060 = vmatprep.subr.bf16.mxu0 %v997
    %1061 = vmatpush1.bf16.msra.mxu0 %v996
    %1062 = vmatprep.subr.bf16.mxu0 %v999
    %1063 = vmatpush1.bf16.msra.mxu0 %v998
    %1064 = vmatprep.subr.bf16.mxu0 %v1001
    %1065 = vmatpush1.bf16.msra.mxu0 %v1000
    %1066 = vmatprep.subr.bf16.mxu0 %v1003
    %1067 = vmatpush1.bf16.msra.mxu0 %v1002
    %1068 = vmatprep.subr.bf16.mxu0 %v1005
    %1069 = vmatpush1.bf16.msra.mxu0 %v1004
    %1070 = vmatprep.subr.bf16.mxu0 %v1007
    %1071 = vmatpush1.bf16.msra.mxu0 %v1006
    %1072 = vmatprep.subr.bf16.mxu0 %v1009
    %1073 = vmatpush1.bf16.msra.mxu0 %v1008
    %1074 = vmatprep.subr.bf16.mxu0 %v1011
    %1075 = vmatpush1.bf16.msra.mxu0 %v1010
    %1076 = vmatprep.subr.bf16.mxu0 %v1013
    %1077 = vmatpush1.bf16.msra.mxu0 %v1012
    %1078 = vmatprep.subr.bf16.mxu0 %v1015
    %1079 = vmatpush1.bf16.msra.mxu0 %v1014
    %1080 = vmatprep.mubr.bf16.mxu0 %v843
    %1081 = vmatmul.mubr.bf16.gmra.mrb[0].mxu0 %v842
    %v1082 = vpop.f32.mrb[0].mxu0
    %v1083 = vadd.f32 %v881, %v1082
    %v1084 = vpop.f32.mrb[0].mxu0
    %v1085 = vadd.f32 %v885, %v1084
    %v1086 = vpop.f32.mrb[0].mxu0
    %v1087 = vadd.f32 %v881, %v1086
    %v1088 = vpop.f32.mrb[0].mxu0
    %v1089 = vadd.f32 %v885, %v1088
    %1090 = vdwg.mxu0
    %v1091 = vmax.f32 %v1083, 0.0
    %v1092 = vmax.f32 %v1085, 0.0
    %v1093 = vmax.f32 %v1087, 0.0
    %v1094 = vmax.f32 %v1089, 0.0
    %v1095 = vpack.c.bf16 %v1093, %v1091
    %v1096 = vpack.c.bf16 %v1094, %v1092
    %v1097 = vld [vmem:[%s5] sm:$0xf]
    %v1098 = vld [vmem:[%s5 + $0x4] sm:$0xf]
    %v1099 = vld [vmem:[%s5 + $0x8] sm:$0xf]
    %v1100 = vld [vmem:[%s5 + $0xc] sm:$0xf]
    %v1101 = vld [vmem:[%s5 + $0x10] sm:$0xf]
    %v1102 = vld [vmem:[%s5 + $0x14] sm:$0xf]
    %v1103 = vld [vmem:[%s5 + $0x18] sm:$0xf]
    %v1104 = vld [vmem:[%s5 + $0x1c] sm:$0xf]
    %v1105 = vld [vmem:[%s5 + $0x20] sm:$0xf]
    %v1106 = vld [vmem:[%s5 + $0x24] sm:$0xf]
    %v1107 = vld [vmem:[%s5 + $0x28] sm:$0xf]
    %v1108 = vld [vmem:[%s5 + $0x2c] sm:$0xf]
    %v1109 = vld [vmem:[%s5 + $0x30] sm:$0xf]
    %v1110 = vld [vmem:[%s5 + $0x34] sm:$0xf]
    %v1111 = vld [vmem:[%s5 + $0x38] sm:$0xf]
    %v1112 = vld [vmem:[%s5 + $0x3c] sm:$0xf]
    %v1113 = vld [vmem:[%s5 + $0x40] sm:$0xf]
    %v1114 = vld [vmem:[%s5 + $0x44] sm:$0xf]
    %v1115 = vld [vmem:[%s5 + $0x48] sm:$0xf]
    %v1116 = vld [vmem:[%s5 + $0x4c] sm:$0xf]
    %v1117 = vld [vmem:[%s5 + $0x50] sm:$0xf]
    %v1118 = vld [vmem:[%s5 + $0x54] sm:$0xf]
    %v1119 = vld [vmem:[%s5 + $0x58] sm:$0xf]
    %v1120 = vld [vmem:[%s5 + $0x5c] sm:$0xf]
    %v1121 = vld [vmem:[%s5 + $0x60] sm:$0xf]
    %v1122 = vld [vmem:[%s5 + $0x64] sm:$0xf]
    %v1123 = vld [vmem:[%s5 + $0x68] sm:$0xf]
    %v1124 = vld [vmem:[%s5 + $0x6c] sm:$0xf]
    %v1125 = vld [vmem:[%s5 + $0x70] sm:$0xf]
    %v1126 = vld [vmem:[%s5 + $0x74] sm:$0xf]
    %v1127 = vld [vmem:[%s5 + $0x78] sm:$0xf]
    %v1128 = vld [vmem:[%s5 + $0x7c] sm:$0xf]
    %v1129 = vld [vmem:[%s6] sm:$0x1]
    %v1131 = vlaneseq
    %v1132 = vshrl.u32 %v1131, 7
    %v1133 = vsub.s32 0, %v1132
    %v1134 = vrot.slane %v1129, %v1133
    %v1168 = vunpack.c.l.b16 %v1097
    %v1169 = vunpack.c.l.b16 %v1098
    %v1170 = vunpack.c.l.b16 %v1099
    %v1171 = vunpack.c.l.b16 %v1100
    %v1172 = vunpack.c.l.b16 %v1101
    %v1173 = vunpack.c.l.b16 %v1102
    %v1174 = vunpack.c.l.b16 %v1103
    %v1175 = vunpack.c.l.b16 %v1104
    %v1176 = vunpack.c.l.b16 %v1105
    %v1177 = vunpack.c.l.b16 %v1106
    %v1178 = vunpack.c.l.b16 %v1107
    %v1179 = vunpack.c.l.b16 %v1108
    %v1180 = vunpack.c.l.b16 %v1109
    %v1181 = vunpack.c.l.b16 %v1110
    %v1182 = vunpack.c.l.b16 %v1111
    %v1183 = vunpack.c.l.b16 %v1112
    %v1184 = vunpack.c.l.b16 %v1113
    %v1185 = vunpack.c.l.b16 %v1114
    %v1186 = vunpack.c.l.b16 %v1115
    %v1187 = vunpack.c.l.b16 %v1116
    %v1188 = vunpack.c.l.b16 %v1117
    %v1189 = vunpack.c.l.b16 %v1118
    %v1190 = vunpack.c.l.b16 %v1119
    %v1191 = vunpack.c.l.b16 %v1120
    %v1192 = vunpack.c.l.b16 %v1121
    %v1193 = vunpack.c.l.b16 %v1122
    %v1194 = vunpack.c.l.b16 %v1123
    %v1195 = vunpack.c.l.b16 %v1124
    %v1196 = vunpack.c.l.b16 %v1125
    %v1197 = vunpack.c.l.b16 %v1126
    %v1198 = vunpack.c.l.b16 %v1127
    %v1199 = vunpack.c.l.b16 %v1128
    %v1200 = vpack.c.b16 %v1169, %v1168
    %v1201 = vpack.c.b16 %v1171, %v1170
    %v1202 = vpack.c.b16 %v1173, %v1172
    %v1203 = vpack.c.b16 %v1175, %v1174
    %v1204 = vpack.c.b16 %v1177, %v1176
    %v1205 = vpack.c.b16 %v1179, %v1178
    %v1206 = vpack.c.b16 %v1181, %v1180
    %v1207 = vpack.c.b16 %v1183, %v1182
    %v1208 = vpack.c.b16 %v1185, %v1184
    %v1209 = vpack.c.b16 %v1187, %v1186
    %v1210 = vpack.c.b16 %v1189, %v1188
    %v1211 = vpack.c.b16 %v1191, %v1190
    %v1212 = vpack.c.b16 %v1193, %v1192
    %v1213 = vpack.c.b16 %v1195, %v1194
    %v1214 = vpack.c.b16 %v1197, %v1196
    %v1215 = vpack.c.b16 %v1199, %v1198
    %1232 = vmatprep.subr.bf16.mxu0 0
    %1233 = vmatpush1.bf16.msra.mxu0 %v1200
    %1234 = vmatprep.subr.bf16.mxu0 0
    %1235 = vmatpush1.bf16.msra.mxu0 %v1201
    %1236 = vmatprep.subr.bf16.mxu0 0
    %1237 = vmatpush1.bf16.msra.mxu0 %v1202
    %1238 = vmatprep.subr.bf16.mxu0 0
    %1239 = vmatpush1.bf16.msra.mxu0 %v1203
    %1240 = vmatprep.subr.bf16.mxu0 0
    %1241 = vmatpush1.bf16.msra.mxu0 %v1204
    %1242 = vmatprep.subr.bf16.mxu0 0
    %1243 = vmatpush1.bf16.msra.mxu0 %v1205
    %1244 = vmatprep.subr.bf16.mxu0 0
    %1245 = vmatpush1.bf16.msra.mxu0 %v1206
    %1246 = vmatprep.subr.bf16.mxu0 0
    %1247 = vmatpush1.bf16.msra.mxu0 %v1207
    %1248 = vmatprep.subr.bf16.mxu0 0
    %1249 = vmatpush1.bf16.msra.mxu0 %v1208
    %1250 = vmatprep.subr.bf16.mxu0 0
    %1251 = vmatpush1.bf16.msra.mxu0 %v1209
    %1252 = vmatprep.subr.bf16.mxu0 0
    %1253 = vmatpush1.bf16.msra.mxu0 %v1210
    %1254 = vmatprep.subr.bf16.mxu0 0
    %1255 = vmatpush1.bf16.msra.mxu0 %v1211
    %1256 = vmatprep.subr.bf16.mxu0 0
    %1257 = vmatpush1.bf16.msra.mxu0 %v1212
    %1258 = vmatprep.subr.bf16.mxu0 0
    %1259 = vmatpush1.bf16.msra.mxu0 %v1213
    %1260 = vmatprep.subr.bf16.mxu0 0
    %1261 = vmatpush1.bf16.msra.mxu0 %v1214
    %1262 = vmatprep.subr.bf16.mxu0 0
    %1263 = vmatpush1.bf16.msra.mxu0 %v1215
    %1264 = vmatprep.mubr.bf16.mxu0 %v1096
    %1265 = vmatmul.mubr.bf16.gmra.mrb[0].mxu0 %v1095
    %v1266 = vpop.f32.mrb[0].mxu0
    %v1267 = vadd.f32 %v1134, %v1266
    %v1268 = vpop.f32.mrb[0].mxu0
    %v1269 = vpop.f32.mrb[0].mxu0
    %v1270 = vadd.f32 %v1134, %v1269
    %v1271 = vpop.f32.mrb[0].mxu0
    %1272 = vdwg.mxu0
    %v1273 = vpack.c.bf16 %v1270, %v1267
    %v1275 = vunpack.c.l.b16 %v1273
    %v1276 = vunpack.c.h.b16 %v1273
    %v1277 = vpack.c.b16 %v1275, %v1275
    %v1278 = vpack.c.b16 %v1276, %v1276
    %1281 = vst [vmem:[%s7] sm:$0xf] %v1277
    %1282 = vst [vmem:[%s7 + $0x4] sm:$0xf] %v1278
    // Predicated region
    $region34: #{mlp_forward.1} parent=1 // pred_check
      _
    $region35: #{mlp_forward.1} parent=1 // pred_check_branch
      %1284 = sbr.rel (0) target = $region37
    $region36: #{mlp_forward.1} parent=1 // pred_region
      _
    $region37: #{mlp_forward.1} parent=1 // pred_fallthru
      _
    // Predicated region
    $region38: #{mlp_forward.1} parent=1 // pred_check
      _
    $region39: #{mlp_forward.1} parent=1 // pred_check_branch
      %1286 = sbr.rel (0) target = $region41
    $region40: #{mlp_forward.1} parent=1 // pred_region
      _
    $region41: #{mlp_forward.1} parent=1 // pred_fallthru
      _
    %1287 = vsyncpa [#allocation3], 1

</llo_original>
